<compile_context>
chip_gen: v5e
topology: v5e:2x2
jax: 0.10.0
libtpu: 0.0.40
codegen_flags: <defaults>
</compile_context>

<pallas_src>
import numpy as np
import jax
import jax.numpy as jnp
from jax.experimental import pallas as pl
from jax.experimental.pallas import tpu as pltpu


# ----------------------------------------------------------------- kernel helpers
def _im2col_3x3(x_flat, H, W):
    """(C, H*W) -> (9*C, H*W) patches of a 3x3 'same' (zero-padded) conv.

    Tap (ky, kx) row-block t = ky*3 + kx holds, at flat position p = y*W + x,
    the input value at (y + ky - 1, x + kx - 1) (0 outside the image). Taps are
    static lane-shifts of a zero-padded flat buffer, so the data never leaves
    the lane-dense (C, H*W) layout (no reshape relayouts).
    """
    C, HW = x_flat.shape
    P = W + 1                                            # covers largest shift
    zpad = jnp.zeros((C, P), jnp.float32)
    xp = jnp.concatenate([zpad, x_flat, zpad], axis=1)   # (C, HW + 2P)

    col = jax.lax.broadcasted_iota(jnp.int32, (1, HW), 1) % W
    not_left = col > 0
    not_right = col < (W - 1)

    pieces = []
    for dy in (-1, 0, 1):
        for dx in (-1, 0, 1):
            s = P + dy * W + dx                          # static, >= 0
            t = xp[:, s:s + HW]                          # value at p + dy*W + dx
            if dx == -1:                                 # mask row wrap (vertical
                t = jnp.where(not_left, t, 0.0)          # OOB already reads zeros)
            elif dx == 1:
                t = jnp.where(not_right, t, 0.0)
            pieces.append(t)
    return jnp.concatenate(pieces, axis=0)               # (9*C, HW)


def _make_up_kernel(H, W, mxu_dtype=jnp.float32):
    """Fused upsample + pad + concat + double_conv kernel for one batch element."""

    def kernel(x1_ref, x2_ref, up_ref, w1_ref, s1_ref, b1_ref,
               w2_ref, s2_ref, b2_ref, o_ref):
        # Bilinear 2x upsample (+ asym zero pad) of x1 as ONE lane-dense matmul
        # with a static interpolation matrix: (C1, h1*w1) @ (h1*w1, H*W).
        x1u = jnp.dot(x1_ref[...].astype(mxu_dtype), up_ref[...].astype(mxu_dtype),
                      preferred_element_type=jnp.float32)        # (C1, H*W)

        # torch.cat([x2, x1], dim=1): channel (sublane) concat.
        xcat = jnp.concatenate([x2_ref[...].astype(jnp.float32), x1u], axis=0)

        # conv3x3 -> BN -> ReLU   (single im2col matmul, K = 9*(C1+C2))
        p1 = _im2col_3x3(xcat, H, W)                             # (9*Ctot, H*W)
        h = jnp.dot(w1_ref[...].astype(mxu_dtype), p1.astype(mxu_dtype),
                    preferred_element_type=jnp.float32)          # (Cout, H*W)
        h = jnp.maximum(h * s1_ref[...] + b1_ref[...], 0.0)

        # conv3x3 -> BN -> ReLU   (K = 9*Cout)
        p2 = _im2col_3x3(h, H, W)
        o = jnp.dot(w2_ref[...].astype(mxu_dtype), p2.astype(mxu_dtype),
                    preferred_element_type=jnp.float32)
        o = jnp.maximum(o * s2_ref[...] + b2_ref[...], 0.0)
        o_ref[...] = o.astype(o_ref.dtype)

    return kernel


# ----------------------------------------------------------------- static matrices
def _bilinear_matrix(n_in, n_out):
    """(n_out, n_in) interpolation matrix: bilinear resize, align_corners=True."""
    if n_in == 1:
        return np.ones((n_out, 1), np.float32)
    s = np.arange(n_out, dtype=np.float64) * (n_in - 1) / (n_out - 1)
    i0 = np.clip(np.floor(s).astype(np.int64), 0, n_in - 1)
    i1 = np.minimum(i0 + 1, n_in - 1)
    f = s - i0
    U = np.zeros((n_out, n_in), np.float64)
    U[np.arange(n_out), i0] += 1.0 - f
    U[np.arange(n_out), i1] += f
    return U.astype(np.float32)


def _upsample_pad_matrix(h_in, w_in, H, W):
    """(h_in*w_in, H*W) matrix M so that flat(pad(upsample2x(img))) = flat(img) @ M."""
    h_up, w_up = 2 * h_in, 2 * w_in
    dY, dX = H - h_up, W - w_up
    assert dY >= 0 and dX >= 0, "x2 must be at least as large as upsampled x1"
    Uy = np.zeros((H, h_in), np.float32)
    Uy[dY // 2: dY // 2 + h_up] = _bilinear_matrix(h_in, h_up)
    Ux = np.zeros((W, w_in), np.float32)
    Ux[dX // 2: dX // 2 + w_up] = _bilinear_matrix(w_in, w_up)
    # TODO(synk): for large feature maps use the separable (Uy, Ux) form instead
    # of the dense Kronecker matrix below.
    # kron(Uy, Ux)[y*W + x, j*w_in + l] = Uy[y, j] * Ux[x, l]
    return np.ascontiguousarray(np.kron(Uy, Ux).T)       # (h_in*w_in, H*W)


# ----------------------------------------------------------------- forward wrapper
def up_forward(x1_nchw, x2_nchw, params, mxu_dtype=jnp.float32):
    """Forward pass of `up` (bilinear branch). NCHW in, NCHW out.

    params = ((w1, scale1, bias1), (w2, scale2, bias2)); w is OIHW, scale/bias are
    the folded (BatchNorm running-stats + conv bias) per-channel affine.
    """
    (w1, s1, b1), (w2, s2, b2) = params
    N, C1, h_in, w_in = x1_nchw.shape
    N2, C2, H, W = x2_nchw.shape
    assert N == N2
    Cout = w1.shape[0]
    Ctot = C1 + C2
    assert w1.shape[1] == Ctot and w2.shape[1] == Cout
    HW = H * W

    # Flat, lane-dense views (channels on sublanes, spatial on lanes).
    x1f = x1_nchw.reshape(N, C1, h_in * w_in)
    x2f = x2_nchw.reshape(N, C2, HW)
    up_mat = jnp.asarray(_upsample_pad_matrix(h_in, w_in, H, W))

    # OIHW -> (Cout, 9*Cin): rows tap-major / channel-minor, matching the
    # kernel's im2col ordering (and torch.cat([x2, x1], dim=1) channel order).
    w1m = jnp.transpose(w1, (0, 2, 3, 1)).reshape(Cout, 9 * Ctot)
    w2m = jnp.transpose(w2, (0, 2, 3, 1)).reshape(Cout, 9 * Cout)
    s1c, b1c = s1.reshape(Cout, 1), b1.reshape(Cout, 1)
    s2c, b2c = s2.reshape(Cout, 1), b2.reshape(Cout, 1)

    grid_spec = pltpu.PrefetchScalarGridSpec(
        num_scalar_prefetch=0,
        grid=(N,),
        in_specs=[
            pl.BlockSpec((pl.Squeezed(), C1, h_in * w_in), lambda n: (n, 0, 0)),
            pl.BlockSpec((pl.Squeezed(), C2, HW), lambda n: (n, 0, 0)),
            # Constant index maps: stay VMEM-resident across the batch grid.
            pl.BlockSpec((h_in * w_in, HW), lambda n: (0, 0)),
            pl.BlockSpec((Cout, 9 * Ctot), lambda n: (0, 0)),
            pl.BlockSpec((Cout, 1), lambda n: (0, 0)),
            pl.BlockSpec((Cout, 1), lambda n: (0, 0)),
            pl.BlockSpec((Cout, 9 * Cout), lambda n: (0, 0)),
            pl.BlockSpec((Cout, 1), lambda n: (0, 0)),
            pl.BlockSpec((Cout, 1), lambda n: (0, 0)),
        ],
        out_specs=pl.BlockSpec((pl.Squeezed(), Cout, HW), lambda n: (n, 0, 0)),
    )
    out_flat = pl.pallas_call(
        _make_up_kernel(H, W, mxu_dtype),
        out_shape=jax.ShapeDtypeStruct((N, Cout, HW), x2_nchw.dtype),
        grid_spec=grid_spec,
        compiler_params=pltpu.CompilerParams(
            dimension_semantics=("parallel",)),     # batch axis: parallel on v7x megacore
    )(x1f, x2f, up_mat, w1m, s1c, b1c, w2m, s2c, b2c)
    return out_flat.reshape(N, Cout, H, W)


# ----------------------------------------------------------------- params / reference
def fold_bn(conv_bias, gamma, beta, mean, var, eps=1e-5):
    scale = gamma / jnp.sqrt(var + eps)
    bias = beta + (conv_bias - mean) * scale
    return scale.astype(jnp.float32), bias.astype(jnp.float32)


def make_conv_bn_params(key, in_ch, out_ch):
    k1, k2, k3, k4, k5, k6 = jax.random.split(key, 6)
    w = jax.random.normal(k1, (out_ch, in_ch, 3, 3), jnp.float32) * 0.1   # OIHW
    b = jax.random.normal(k2, (out_ch,), jnp.float32) * 0.1
    gamma = 1.0 + 0.1 * jax.random.normal(k3, (out_ch,), jnp.float32)
    beta = 0.1 * jax.random.normal(k4, (out_ch,), jnp.float32)
    mean = 0.1 * jax.random.normal(k5, (out_ch,), jnp.float32)
    var = jnp.abs(jax.random.normal(k6, (out_ch,), jnp.float32)) + 0.5
    scale, bias = fold_bn(b, gamma, beta, mean, var)
    return w, scale, bias


def _up_reference(x1, x2, params):
    """Pure-JAX reference (gather upsample + lax conv) for numerical validation."""
    (w1, s1, b1), (w2, s2, b2) = params
    _, _, h_in, w_in = x1.shape
    _, _, H, W = x2.shape
    h_up, w_up = 2 * h_in, 2 * w_in

    def coords(n_in, n_out):
        s = jnp.arange(n_out, dtype=jnp.float32) * (n_in - 1) / (n_out - 1)
        i0 = jnp.floor(s).astype(jnp.int32)
        i1 = jnp.minimum(i0 + 1, n_in - 1)
        return i0, i1, s - i0.astype(jnp.float32)

    y0, y1, fy = coords(h_in, h_up)
    c0, c1, fx = coords(w_in, w_up)
    rows = (x1[:, :, y0, :] * (1.0 - fy)[None, None, :, None]
            + x1[:, :, y1, :] * fy[None, None, :, None])
    up = (rows[:, :, :, c0] * (1.0 - fx)[None, None, None, :]
          + rows[:, :, :, c1] * fx[None, None, None, :])
    dY, dX = H - h_up, W - w_up
    up = jnp.pad(up, ((0, 0), (0, 0),
                      (dY // 2, dY - dY // 2), (dX // 2, dX - dX // 2)))
    x = jnp.concatenate([x2, up], axis=1)

    def conv_bn_relu(v, w, s, b):
        y = jax.lax.conv_general_dilated(
            v, w, window_strides=(1, 1), padding=((1, 1), (1, 1)),
            dimension_numbers=("NCHW", "OIHW", "NCHW"))
        y = y * s[None, :, None, None] + b[None, :, None, None]
        return jnp.maximum(y, 0.0)

    return conv_bn_relu(conv_bn_relu(x, w1, s1, b1), w2, s2, b2)


if __name__ == "__main__":
    key = jax.random.PRNGKey(0)
    k_x1, k_x2, k_p1, k_p2 = jax.random.split(key, 4)

    # up(in_ch=4, in_ch_2=4, out_ch=8, bilinear=True)
    N, in_ch, in_ch_2, out_ch = 2, 4, 4, 8
    x1 = jax.random.normal(k_x1, (N, in_ch, 8, 8), jnp.float32)      # low-res feature
    x2 = jax.random.normal(k_x2, (N, in_ch_2, 16, 16), jnp.float32)  # skip connection

    params = (make_conv_bn_params(k_p1, in_ch + in_ch_2, out_ch),
              make_conv_bn_params(k_p2, out_ch, out_ch))

    out = jax.jit(up_forward)(x1, x2, params)
    jax.block_until_ready(out)
    assert out.shape == (N, out_ch, 16, 16), out.shape

    ref = _up_reference(x1, x2, params)
    err = float(jnp.max(jnp.abs(out - ref)))
    assert err < 1e-3, f"max abs err vs reference: {err}"
    print("KERNEL_OK")
</pallas_src>

<mosaic_0001>
module attributes {stable_mosaic.version = 11 : i64} {
  func.func @kernel(%arg0: i32, %arg1: memref<1x4x64xf32, #tpu.memory_space<vmem>>, %arg2: memref<1x4x256xf32, #tpu.memory_space<vmem>>, %arg3: memref<64x256xf32, #tpu.memory_space<vmem>>, %arg4: memref<8x72xf32, #tpu.memory_space<vmem>>, %arg5: memref<8x1xf32, #tpu.memory_space<vmem>>, %arg6: memref<8x1xf32, #tpu.memory_space<vmem>>, %arg7: memref<8x72xf32, #tpu.memory_space<vmem>>, %arg8: memref<8x1xf32, #tpu.memory_space<vmem>>, %arg9: memref<8x1xf32, #tpu.memory_space<vmem>>, %arg10: memref<1x8x256xf32, #tpu.memory_space<vmem>>) attributes {dimension_semantics = [#tpu.dimension_semantics<parallel>], iteration_bounds = array<i64: 2>, scalar_prefetch = 0 : i64, scratch_operands = 0 : i64, tpu.core_type = #tpu.core_type<tc>, window_params = [{transform_indices = @transform_0, window_bounds = array<i64: 1, 4, 64>}, {transform_indices = @transform_1, window_bounds = array<i64: 1, 4, 256>}, {pipeline_mode = #tpu.pipeline_mode<synchronous>, transform_indices = @transform_2, window_bounds = array<i64: 64, 256>}, {pipeline_mode = #tpu.pipeline_mode<synchronous>, transform_indices = @transform_3, window_bounds = array<i64: 8, 72>}, {pipeline_mode = #tpu.pipeline_mode<synchronous>, transform_indices = @transform_4, window_bounds = array<i64: 8, 1>}, {pipeline_mode = #tpu.pipeline_mode<synchronous>, transform_indices = @transform_5, window_bounds = array<i64: 8, 1>}, {pipeline_mode = #tpu.pipeline_mode<synchronous>, transform_indices = @transform_6, window_bounds = array<i64: 8, 72>}, {pipeline_mode = #tpu.pipeline_mode<synchronous>, transform_indices = @transform_7, window_bounds = array<i64: 8, 1>}, {pipeline_mode = #tpu.pipeline_mode<synchronous>, transform_indices = @transform_8, window_bounds = array<i64: 8, 1>}, {transform_indices = @transform_9, window_bounds = array<i64: 1, 8, 256>}]} {
    %c0 = arith.constant 0 : index
    %c0_0 = arith.constant 0 : index
    %c0_1 = arith.constant 0 : index
    %0 = vector.load %arg1[%c0, %c0_0, %c0_1] : memref<1x4x64xf32, #tpu.memory_space<vmem>>, vector<1x4x64xf32>
    %1 = vector.shape_cast %0 : vector<1x4x64xf32> to vector<4x64xf32>
    %c0_2 = arith.constant 0 : index
    %c0_3 = arith.constant 0 : index
    %2 = vector.load %arg3[%c0_2, %c0_3] : memref<64x256xf32, #tpu.memory_space<vmem>>, vector<64x256xf32>
    %cst = arith.constant dense<0.000000e+00> : vector<4x256xf32>
    %3 = tpu.matmul %1, %2, %cst {dimension_numbers = #tpu.dot_dimension_numbers<[1], [0], [0], [1], [0, 0, 1, 1], [], []>} : vector<4x64xf32>, vector<64x256xf32>, vector<4x256xf32> -> vector<4x256xf32>
    %c0_4 = arith.constant 0 : index
    %c0_5 = arith.constant 0 : index
    %c0_6 = arith.constant 0 : index
    %4 = vector.load %arg2[%c0_4, %c0_5, %c0_6] : memref<1x4x256xf32, #tpu.memory_space<vmem>>, vector<1x4x256xf32>
    %5 = vector.shape_cast %4 : vector<1x4x256xf32> to vector<4x256xf32>
    %6 = tpu.concatenate %5, %3 in 0 : vector<4x256xf32>, vector<4x256xf32> -> vector<8x256xf32>
    %cst_7 = arith.constant 0.000000e+00 : f32
    %7 = vector.broadcast %cst_7 : f32 to vector<8x17xf32>
    %8 = tpu.concatenate %7, %6, %7 in 1 : vector<8x17xf32>, vector<8x256xf32>, vector<8x17xf32> -> vector<8x290xf32>
    %9 = tpu.iota {dimensions = array<i32: 1>} : vector<1x256xi32>
    %c16_i32 = arith.constant 16 : i32
    %c0_i32 = arith.constant 0 : i32
    %10 = arith.cmpi eq, %c16_i32, %c0_i32 : i32
    %c1_i32 = arith.constant 1 : i32
    %11 = arith.select %10, %c1_i32, %c16_i32 : i32
    %12 = vector.broadcast %11 : i32 to vector<1x256xi32>
    %13 = arith.remsi %9, %12 : vector<1x256xi32>
    %c0_i32_8 = arith.constant 0 : i32
    %14 = vector.broadcast %c0_i32_8 : i32 to vector<1x256xi32>
    %15 = arith.cmpi ne, %13, %14 : vector<1x256xi32>
    %c0_i32_9 = arith.constant 0 : i32
    %16 = vector.broadcast %c0_i32_9 : i32 to vector<1x256xi32>
    %17 = arith.cmpi slt, %13, %16 : vector<1x256xi32>
    %c0_i32_10 = arith.constant 0 : i32
    %18 = arith.cmpi slt, %11, %c0_i32_10 : i32
    %19 = vector.broadcast %18 : i1 to vector<1x256xi1>
    %20 = vector.broadcast %19 : vector<1x256xi1> to vector<1x256xi1>
    %21 = arith.xori %17, %20 : vector<1x256xi1>
    %22 = arith.andi %21, %15 : vector<1x256xi1>
    %23 = vector.broadcast %11 : i32 to vector<1x256xi32>
    %24 = arith.addi %13, %23 : vector<1x256xi32>
    %25 = arith.select %22, %24, %13 : vector<1x256xi1>, vector<1x256xi32>
    %c0_i32_11 = arith.constant 0 : i32
    %26 = vector.broadcast %c0_i32_11 : i32 to vector<1x256xi32>
    %27 = arith.cmpi sgt, %25, %26 : vector<1x256xi32>
    %c15_i32 = arith.constant 15 : i32
    %28 = vector.broadcast %c15_i32 : i32 to vector<1x256xi32>
    %29 = arith.cmpi slt, %25, %28 : vector<1x256xi32>
    %30 = vector.extract_strided_slice %8 {offsets = [0, 0], sizes = [8, 256], strides = [1, 1]} : vector<8x290xf32> to vector<8x256xf32>
    %cst_12 = arith.constant 0.000000e+00 : f32
    %31 = vector.shape_cast %27 : vector<1x256xi1> to vector<1x256xi1>
    %32 = vector.broadcast %31 : vector<1x256xi1> to vector<8x256xi1>
    %33 = vector.broadcast %cst_12 : f32 to vector<8x256xf32>
    %34 = arith.select %32, %30, %33 : vector<8x256xi1>, vector<8x256xf32>
    %35 = vector.extract_strided_slice %8 {offsets = [0, 1], sizes = [8, 256], strides = [1, 1]} : vector<8x290xf32> to vector<8x256xf32>
    %36 = vector.extract_strided_slice %8 {offsets = [0, 2], sizes = [8, 256], strides = [1, 1]} : vector<8x290xf32> to vector<8x256xf32>
    %cst_13 = arith.constant 0.000000e+00 : f32
    %37 = vector.shape_cast %29 : vector<1x256xi1> to vector<1x256xi1>
    %38 = vector.broadcast %37 : vector<1x256xi1> to vector<8x256xi1>
    %39 = vector.broadcast %cst_13 : f32 to vector<8x256xf32>
    %40 = arith.select %38, %36, %39 : vector<8x256xi1>, vector<8x256xf32>
    %41 = vector.extract_strided_slice %8 {offsets = [0, 16], sizes = [8, 256], strides = [1, 1]} : vector<8x290xf32> to vector<8x256xf32>
    %cst_14 = arith.constant 0.000000e+00 : f32
    %42 = vector.shape_cast %27 : vector<1x256xi1> to vector<1x256xi1>
    %43 = vector.broadcast %42 : vector<1x256xi1> to vector<8x256xi1>
    %44 = vector.broadcast %cst_14 : f32 to vector<8x256xf32>
    %45 = arith.select %43, %41, %44 : vector<8x256xi1>, vector<8x256xf32>
    %46 = vector.extract_strided_slice %8 {offsets = [0, 17], sizes = [8, 256], strides = [1, 1]} : vector<8x290xf32> to vector<8x256xf32>
    %47 = vector.extract_strided_slice %8 {offsets = [0, 18], sizes = [8, 256], strides = [1, 1]} : vector<8x290xf32> to vector<8x256xf32>
    %cst_15 = arith.constant 0.000000e+00 : f32
    %48 = vector.shape_cast %29 : vector<1x256xi1> to vector<1x256xi1>
    %49 = vector.broadcast %48 : vector<1x256xi1> to vector<8x256xi1>
    %50 = vector.broadcast %cst_15 : f32 to vector<8x256xf32>
    %51 = arith.select %49, %47, %50 : vector<8x256xi1>, vector<8x256xf32>
    %52 = vector.extract_strided_slice %8 {offsets = [0, 32], sizes = [8, 256], strides = [1, 1]} : vector<8x290xf32> to vector<8x256xf32>
    %cst_16 = arith.constant 0.000000e+00 : f32
    %53 = vector.shape_cast %27 : vector<1x256xi1> to vector<1x256xi1>
    %54 = vector.broadcast %53 : vector<1x256xi1> to vector<8x256xi1>
    %55 = vector.broadcast %cst_16 : f32 to vector<8x256xf32>
    %56 = arith.select %54, %52, %55 : vector<8x256xi1>, vector<8x256xf32>
    %57 = vector.extract_strided_slice %8 {offsets = [0, 33], sizes = [8, 256], strides = [1, 1]} : vector<8x290xf32> to vector<8x256xf32>
    %58 = vector.extract_strided_slice %8 {offsets = [0, 34], sizes = [8, 256], strides = [1, 1]} : vector<8x290xf32> to vector<8x256xf32>
    %cst_17 = arith.constant 0.000000e+00 : f32
    %59 = vector.shape_cast %29 : vector<1x256xi1> to vector<1x256xi1>
    %60 = vector.broadcast %59 : vector<1x256xi1> to vector<8x256xi1>
    %61 = vector.broadcast %cst_17 : f32 to vector<8x256xf32>
    %62 = arith.select %60, %58, %61 : vector<8x256xi1>, vector<8x256xf32>
    %63 = tpu.concatenate %34, %35, %40, %45, %46, %51, %56, %57, %62 in 0 : vector<8x256xf32>, vector<8x256xf32>, vector<8x256xf32>, vector<8x256xf32>, vector<8x256xf32>, vector<8x256xf32>, vector<8x256xf32>, vector<8x256xf32>, vector<8x256xf32> -> vector<72x256xf32>
    %c0_18 = arith.constant 0 : index
    %c0_19 = arith.constant 0 : index
    %64 = vector.load %arg4[%c0_18, %c0_19] : memref<8x72xf32, #tpu.memory_space<vmem>>, vector<8x72xf32>
    %cst_20 = arith.constant dense<0.000000e+00> : vector<8x256xf32>
    %65 = tpu.matmul %64, %63, %cst_20 {dimension_numbers = #tpu.dot_dimension_numbers<[1], [0], [0], [1], [0, 0, 1, 1], [], []>} : vector<8x72xf32>, vector<72x256xf32>, vector<8x256xf32> -> vector<8x256xf32>
    %c0_21 = arith.constant 0 : index
    %c0_22 = arith.constant 0 : index
    %66 = vector.load %arg5[%c0_21, %c0_22] : memref<8x1xf32, #tpu.memory_space<vmem>>, vector<8x1xf32>
    %67 = vector.broadcast %66 : vector<8x1xf32> to vector<8x256xf32>
    %68 = arith.mulf %65, %67 : vector<8x256xf32>
    %c0_23 = arith.constant 0 : index
    %c0_24 = arith.constant 0 : index
    %69 = vector.load %arg6[%c0_23, %c0_24] : memref<8x1xf32, #tpu.memory_space<vmem>>, vector<8x1xf32>
    %70 = vector.broadcast %69 : vector<8x1xf32> to vector<8x256xf32>
    %71 = arith.addf %68, %70 : vector<8x256xf32>
    %cst_25 = arith.constant 0.000000e+00 : f32
    %72 = vector.broadcast %cst_25 : f32 to vector<8x256xf32>
    %73 = arith.maximumf %71, %72 : vector<8x256xf32>
    %cst_26 = arith.constant 0.000000e+00 : f32
    %74 = vector.broadcast %cst_26 : f32 to vector<8x17xf32>
    %75 = tpu.concatenate %74, %73, %74 in 1 : vector<8x17xf32>, vector<8x256xf32>, vector<8x17xf32> -> vector<8x290xf32>
    %76 = tpu.iota {dimensions = array<i32: 1>} : vector<1x256xi32>
    %c16_i32_27 = arith.constant 16 : i32
    %c0_i32_28 = arith.constant 0 : i32
    %77 = arith.cmpi eq, %c16_i32_27, %c0_i32_28 : i32
    %c1_i32_29 = arith.constant 1 : i32
    %78 = arith.select %77, %c1_i32_29, %c16_i32_27 : i32
    %79 = vector.broadcast %78 : i32 to vector<1x256xi32>
    %80 = arith.remsi %76, %79 : vector<1x256xi32>
    %c0_i32_30 = arith.constant 0 : i32
    %81 = vector.broadcast %c0_i32_30 : i32 to vector<1x256xi32>
    %82 = arith.cmpi ne, %80, %81 : vector<1x256xi32>
    %c0_i32_31 = arith.constant 0 : i32
    %83 = vector.broadcast %c0_i32_31 : i32 to vector<1x256xi32>
    %84 = arith.cmpi slt, %80, %83 : vector<1x256xi32>
    %c0_i32_32 = arith.constant 0 : i32
    %85 = arith.cmpi slt, %78, %c0_i32_32 : i32
    %86 = vector.broadcast %85 : i1 to vector<1x256xi1>
    %87 = vector.broadcast %86 : vector<1x256xi1> to vector<1x256xi1>
    %88 = arith.xori %84, %87 : vector<1x256xi1>
    %89 = arith.andi %88, %82 : vector<1x256xi1>
    %90 = vector.broadcast %78 : i32 to vector<1x256xi32>
    %91 = arith.addi %80, %90 : vector<1x256xi32>
    %92 = arith.select %89, %91, %80 : vector<1x256xi1>, vector<1x256xi32>
    %c0_i32_33 = arith.constant 0 : i32
    %93 = vector.broadcast %c0_i32_33 : i32 to vector<1x256xi32>
    %94 = arith.cmpi sgt, %92, %93 : vector<1x256xi32>
    %c15_i32_34 = arith.constant 15 : i32
    %95 = vector.broadcast %c15_i32_34 : i32 to vector<1x256xi32>
    %96 = arith.cmpi slt, %92, %95 : vector<1x256xi32>
    %97 = vector.extract_strided_slice %75 {offsets = [0, 0], sizes = [8, 256], strides = [1, 1]} : vector<8x290xf32> to vector<8x256xf32>
    %cst_35 = arith.constant 0.000000e+00 : f32
    %98 = vector.shape_cast %94 : vector<1x256xi1> to vector<1x256xi1>
    %99 = vector.broadcast %98 : vector<1x256xi1> to vector<8x256xi1>
    %100 = vector.broadcast %cst_35 : f32 to vector<8x256xf32>
    %101 = arith.select %99, %97, %100 : vector<8x256xi1>, vector<8x256xf32>
    %102 = vector.extract_strided_slice %75 {offsets = [0, 1], sizes = [8, 256], strides = [1, 1]} : vector<8x290xf32> to vector<8x256xf32>
    %103 = vector.extract_strided_slice %75 {offsets = [0, 2], sizes = [8, 256], strides = [1, 1]} : vector<8x290xf32> to vector<8x256xf32>
    %cst_36 = arith.constant 0.000000e+00 : f32
    %104 = vector.shape_cast %96 : vector<1x256xi1> to vector<1x256xi1>
    %105 = vector.broadcast %104 : vector<1x256xi1> to vector<8x256xi1>
    %106 = vector.broadcast %cst_36 : f32 to vector<8x256xf32>
    %107 = arith.select %105, %103, %106 : vector<8x256xi1>, vector<8x256xf32>
    %108 = vector.extract_strided_slice %75 {offsets = [0, 16], sizes = [8, 256], strides = [1, 1]} : vector<8x290xf32> to vector<8x256xf32>
    %cst_37 = arith.constant 0.000000e+00 : f32
    %109 = vector.shape_cast %94 : vector<1x256xi1> to vector<1x256xi1>
    %110 = vector.broadcast %109 : vector<1x256xi1> to vector<8x256xi1>
    %111 = vector.broadcast %cst_37 : f32 to vector<8x256xf32>
    %112 = arith.select %110, %108, %111 : vector<8x256xi1>, vector<8x256xf32>
    %113 = vector.extract_strided_slice %75 {offsets = [0, 17], sizes = [8, 256], strides = [1, 1]} : vector<8x290xf32> to vector<8x256xf32>
    %114 = vector.extract_strided_slice %75 {offsets = [0, 18], sizes = [8, 256], strides = [1, 1]} : vector<8x290xf32> to vector<8x256xf32>
    %cst_38 = arith.constant 0.000000e+00 : f32
    %115 = vector.shape_cast %96 : vector<1x256xi1> to vector<1x256xi1>
    %116 = vector.broadcast %115 : vector<1x256xi1> to vector<8x256xi1>
    %117 = vector.broadcast %cst_38 : f32 to vector<8x256xf32>
    %118 = arith.select %116, %114, %117 : vector<8x256xi1>, vector<8x256xf32>
    %119 = vector.extract_strided_slice %75 {offsets = [0, 32], sizes = [8, 256], strides = [1, 1]} : vector<8x290xf32> to vector<8x256xf32>
    %cst_39 = arith.constant 0.000000e+00 : f32
    %120 = vector.shape_cast %94 : vector<1x256xi1> to vector<1x256xi1>
    %121 = vector.broadcast %120 : vector<1x256xi1> to vector<8x256xi1>
    %122 = vector.broadcast %cst_39 : f32 to vector<8x256xf32>
    %123 = arith.select %121, %119, %122 : vector<8x256xi1>, vector<8x256xf32>
    %124 = vector.extract_strided_slice %75 {offsets = [0, 33], sizes = [8, 256], strides = [1, 1]} : vector<8x290xf32> to vector<8x256xf32>
    %125 = vector.extract_strided_slice %75 {offsets = [0, 34], sizes = [8, 256], strides = [1, 1]} : vector<8x290xf32> to vector<8x256xf32>
    %cst_40 = arith.constant 0.000000e+00 : f32
    %126 = vector.shape_cast %96 : vector<1x256xi1> to vector<1x256xi1>
    %127 = vector.broadcast %126 : vector<1x256xi1> to vector<8x256xi1>
    %128 = vector.broadcast %cst_40 : f32 to vector<8x256xf32>
    %129 = arith.select %127, %125, %128 : vector<8x256xi1>, vector<8x256xf32>
    %130 = tpu.concatenate %101, %102, %107, %112, %113, %118, %123, %124, %129 in 0 : vector<8x256xf32>, vector<8x256xf32>, vector<8x256xf32>, vector<8x256xf32>, vector<8x256xf32>, vector<8x256xf32>, vector<8x256xf32>, vector<8x256xf32>, vector<8x256xf32> -> vector<72x256xf32>
    %c0_41 = arith.constant 0 : index
    %c0_42 = arith.constant 0 : index
    %131 = vector.load %arg7[%c0_41, %c0_42] : memref<8x72xf32, #tpu.memory_space<vmem>>, vector<8x72xf32>
    %cst_43 = arith.constant dense<0.000000e+00> : vector<8x256xf32>
    %132 = tpu.matmul %131, %130, %cst_43 {dimension_numbers = #tpu.dot_dimension_numbers<[1], [0], [0], [1], [0, 0, 1, 1], [], []>} : vector<8x72xf32>, vector<72x256xf32>, vector<8x256xf32> -> vector<8x256xf32>
    %c0_44 = arith.constant 0 : index
    %c0_45 = arith.constant 0 : index
    %133 = vector.load %arg8[%c0_44, %c0_45] : memref<8x1xf32, #tpu.memory_space<vmem>>, vector<8x1xf32>
    %134 = vector.broadcast %133 : vector<8x1xf32> to vector<8x256xf32>
    %135 = arith.mulf %132, %134 : vector<8x256xf32>
    %c0_46 = arith.constant 0 : index
    %c0_47 = arith.constant 0 : index
    %136 = vector.load %arg9[%c0_46, %c0_47] : memref<8x1xf32, #tpu.memory_space<vmem>>, vector<8x1xf32>
    %137 = vector.broadcast %136 : vector<8x1xf32> to vector<8x256xf32>
    %138 = arith.addf %135, %137 : vector<8x256xf32>
    %cst_48 = arith.constant 0.000000e+00 : f32
    %139 = vector.broadcast %cst_48 : f32 to vector<8x256xf32>
    %140 = arith.maximumf %138, %139 : vector<8x256xf32>
    %c0_49 = arith.constant 0 : index
    %c0_50 = arith.constant 0 : index
    %c0_51 = arith.constant 0 : index
    %141 = vector.load %arg10[%c0_49, %c0_50, %c0_51] : memref<1x8x256xf32, #tpu.memory_space<vmem>>, vector<1x8x256xf32>
    %142 = vector.shape_cast %141 : vector<1x8x256xf32> to vector<8x256xf32>
    %143 = vector.shape_cast %140 : vector<8x256xf32> to vector<1x8x256xf32>
    tpu.vector_store %arg10[%c0_49, %c0_50, %c0_51], %143 {strides = array<i32>} : memref<1x8x256xf32, #tpu.memory_space<vmem>>, vector<1x8x256xf32>,
    return
  }
  func.func @transform_0(%arg0: i32) -> (i32, i32, i32) {
    %c0_i32 = arith.constant 0 : i32
    %c0_i32_0 = arith.constant 0 : i32
    %c0_i32_1 = arith.constant 0 : i32
    return %arg0, %c0_i32, %c0_i32_0 : i32, i32, i32
  }
  func.func @transform_1(%arg0: i32) -> (i32, i32, i32) {
    %c0_i32 = arith.constant 0 : i32
    %c0_i32_0 = arith.constant 0 : i32
    %c0_i32_1 = arith.constant 0 : i32
    return %arg0, %c0_i32, %c0_i32_0 : i32, i32, i32
  }
  func.func @transform_2(%arg0: i32) -> (i32, i32) {
    %c0_i32 = arith.constant 0 : i32
    %c0_i32_0 = arith.constant 0 : i32
    %c0_i32_1 = arith.constant 0 : i32
    return %c0_i32, %c0_i32_0 : i32, i32
  }
  func.func @transform_3(%arg0: i32) -> (i32, i32) {
    %c0_i32 = arith.constant 0 : i32
    %c0_i32_0 = arith.constant 0 : i32
    %c0_i32_1 = arith.constant 0 : i32
    return %c0_i32, %c0_i32_0 : i32, i32
  }
  func.func @transform_4(%arg0: i32) -> (i32, i32) {
    %c0_i32 = arith.constant 0 : i32
    %c0_i32_0 = arith.constant 0 : i32
    %c0_i32_1 = arith.constant 0 : i32
    return %c0_i32, %c0_i32_0 : i32, i32
  }
  func.func @transform_5(%arg0: i32) -> (i32, i32) {
    %c0_i32 = arith.constant 0 : i32
    %c0_i32_0 = arith.constant 0 : i32
    %c0_i32_1 = arith.constant 0 : i32
    return %c0_i32, %c0_i32_0 : i32, i32
  }
  func.func @transform_6(%arg0: i32) -> (i32, i32) {
    %c0_i32 = arith.constant 0 : i32
    %c0_i32_0 = arith.constant 0 : i32
    %c0_i32_1 = arith.constant 0 : i32
    return %c0_i32, %c0_i32_0 : i32, i32
  }
  func.func @transform_7(%arg0: i32) -> (i32, i32) {
    %c0_i32 = arith.constant 0 : i32
    %c0_i32_0 = arith.constant 0 : i32
    %c0_i32_1 = arith.constant 0 : i32
    return %c0_i32, %c0_i32_0 : i32, i32
  }
  func.func @transform_8(%arg0: i32) -> (i32, i32) {
    %c0_i32 = arith.constant 0 : i32
    %c0_i32_0 = arith.constant 0 : i32
    %c0_i32_1 = arith.constant 0 : i32
    return %c0_i32, %c0_i32_0 : i32, i32
  }
  func.func @transform_9(%arg0: i32) -> (i32, i32, i32) {
    %c0_i32 = arith.constant 0 : i32
    %c0_i32_0 = arith.constant 0 : i32
    %c0_i32_1 = arith.constant 0 : i32
    return %arg0, %c0_i32, %c0_i32_0 : i32, i32, i32
  }
}

</mosaic_0001>

<llo_original>
// kernel: up_forward.1
$region0: #{up_forward.1}
  #allocation0 [shape = 'u32[]', space=smem, size = 0x4, offset = 0x4, fixed_abs, tag = 'smem constant byte address 0x4 - core index']
  #allocation1 [shape = 'u32[72,128]{1,0:T(1,128)}', space=vmem, size = 0x9000, scoped, tag = 'internal scratch']
  %s0 = inlined_call_operand.vmem [shape: f32[2,4,64], index: 0, kind: input, shape index: {}]
  %s1 = inlined_call_operand.vmem [shape: f32[2,4,256], index: 1, kind: input, shape index: {}]
  %s2 = inlined_call_operand.vmem [shape: f32[64,256], index: 2, kind: input, shape index: {}]
  %s3 = inlined_call_operand.vmem [shape: f32[8,72], index: 3, kind: input, shape index: {}]
  %s4 = inlined_call_operand.vmem [shape: f32[8,1], index: 4, kind: input, shape index: {}]
  %s5 = inlined_call_operand.vmem [shape: f32[8,1], index: 5, kind: input, shape index: {}]
  %s6 = inlined_call_operand.vmem [shape: f32[8,72], index: 6, kind: input, shape index: {}]
  %s7 = inlined_call_operand.vmem [shape: f32[8,1], index: 7, kind: input, shape index: {}]
  %s8 = inlined_call_operand.vmem [shape: f32[8,1], index: 8, kind: input, shape index: {}]
  %s9 = inlined_call_operand.vmem [shape: f32[2,8,256], index: 9, kind: output, shape index: {}]
  %s10 = sld [smem:[#allocation0]]
  $region69: #{up_forward.1} parent=0
    _
  %s12 = ssub.s32 1, %s10
  %s13 = scalar_select 0, %s12, %s10
  loop: start=0, step=1, limit=4
  $region2: #{up_forward.1} parent=0 // loop_pre_header
    _
  $region3: #{up_forward.1} parent=0 // loop_header
    %s15 = sphi 0, %s19
    %p16 = scmp.ge.s32.totalorder %s15, 4
    %s25 = sphi 0, %s27
    %s28 = sphi 0, %s25
    %s29 = sphi 0, %s28
    %s45 = sphi 0, %s29
    %s51 = sphi 0, %s53
    %s54 = sphi 0, %s51
    %s55 = sphi 0, %s54
    %s71 = sphi 0, %s55
    %s75 = sphi 0, %s75
    %s77 = sphi 0, %s75
    %s78 = sphi 0, %s77
    %s92 = sphi 0, %s78
    %s96 = sphi 0, %s96
    %s98 = sphi 0, %s96
    %s99 = sphi 0, %s98
    %s113 = sphi 0, %s99
    %s117 = sphi 0, %s117
    %s119 = sphi 0, %s117
    %s120 = sphi 0, %s119
    %s134 = sphi 0, %s120
    %s138 = sphi 0, %s138
    %s140 = sphi 0, %s138
    %s141 = sphi 0, %s140
    %s155 = sphi 0, %s141
    %s159 = sphi 0, %s159
    %s161 = sphi 0, %s159
    %s162 = sphi 0, %s161
    %s176 = sphi 0, %s162
    %s180 = sphi 0, %s180
    %s182 = sphi 0, %s180
    %s183 = sphi 0, %s182
    %s197 = sphi 0, %s183
    %s201 = sphi 0, %s201
    %s203 = sphi 0, %s201
    %s204 = sphi 0, %s203
    %s218 = sphi 0, %s204
    %s224 = sphi 0, %s226
    %s227 = sphi 0, %s224
    %s228 = sphi 0, %s227
    %s244 = sphi 0, %s228
  $region4: #{up_forward.1} parent=0 // loop_header_branch
    %18 = sbr.rel (%p16) target = $region8
  $region5: #{up_forward.1} parent=0 // loop_body
    %s20 = ssub.s32 %s15, 1
    %s21 = ssub.s32 %s15, 2
    %s22 = sadd.s32 %s15, 1
    %s23 = ssub.s32 %s15, %s22
    %p24 = scmp.eq.s32.totalorder %s23, 0
    %s26 = sadd.s32 %s25, 1
    %s27 = scalar_select %p24, %s25, %s26
    %p30 = pneg %p24
    %p31 = scmp.eq.s32.totalorder %s15, 1
    %p32 = por %p30, %p31
    %p33 = scmp.ne.s32.totalorder %s25, %s28
    %p34 = scmp.eq.s32.totalorder %s15, 0
    %p35 = por %p33, %p34
    %p36 = scmp.ne.s32.totalorder %s25, %s28
    %p37 = scmp.eq.s32.totalorder %s20, 1
    %p38 = por %p36, %p37
    %p39 = scmp.ne.s32.totalorder %s28, %s29
    %p40 = scmp.eq.s32.totalorder %s20, 0
    %p41 = por %p39, %p40
    %p42 = scmp.ne.s32.totalorder %s28, %s29
    %p43 = scmp.eq.s32.totalorder %s21, 1
    %p44 = por %p42, %p43
    %p46 = scmp.ne.s32.totalorder %s29, %s45
    %p47 = scmp.eq.s32.totalorder %s21, 0
    %p48 = por %p46, %p47
    %s49 = ssub.s32 %s15, %s22
    %p50 = scmp.eq.s32.totalorder %s49, 0
    %s52 = sadd.s32 %s51, 1
    %s53 = scalar_select %p50, %s51, %s52
    %p56 = pneg %p50
    %p57 = scmp.eq.s32.totalorder %s15, 1
    %p58 = por %p56, %p57
    %p59 = scmp.ne.s32.totalorder %s51, %s54
    %p60 = scmp.eq.s32.totalorder %s15, 0
    %p61 = por %p59, %p60
    %p62 = scmp.ne.s32.totalorder %s51, %s54
    %p63 = scmp.eq.s32.totalorder %s20, 1
    %p64 = por %p62, %p63
    %p65 = scmp.ne.s32.totalorder %s54, %s55
    %p66 = scmp.eq.s32.totalorder %s20, 0
    %p67 = por %p65, %p66
    %p68 = scmp.ne.s32.totalorder %s54, %s55
    %p69 = scmp.eq.s32.totalorder %s21, 1
    %p70 = por %p68, %p69
    %p72 = scmp.ne.s32.totalorder %s55, %s71
    %p73 = scmp.eq.s32.totalorder %s21, 0
    %p74 = por %p72, %p73
    %s76 = sadd.s32 %s75, 1
    %p79 = scmp.eq.s32.totalorder %s15, 1
    %p80 = scmp.ne.s32.totalorder %s75, %s77
    %p81 = scmp.eq.s32.totalorder %s15, 0
    %p82 = por %p80, %p81
    %p83 = scmp.ne.s32.totalorder %s75, %s77
    %p84 = scmp.eq.s32.totalorder %s20, 1
    %p85 = por %p83, %p84
    %p86 = scmp.ne.s32.totalorder %s77, %s78
    %p87 = scmp.eq.s32.totalorder %s20, 0
    %p88 = por %p86, %p87
    %p89 = scmp.ne.s32.totalorder %s77, %s78
    %p90 = scmp.eq.s32.totalorder %s21, 1
    %p91 = por %p89, %p90
    %p93 = scmp.ne.s32.totalorder %s78, %s92
    %p94 = scmp.eq.s32.totalorder %s21, 0
    %p95 = por %p93, %p94
    %s97 = sadd.s32 %s96, 1
    %p100 = scmp.eq.s32.totalorder %s15, 1
    %p101 = scmp.ne.s32.totalorder %s96, %s98
    %p102 = scmp.eq.s32.totalorder %s15, 0
    %p103 = por %p101, %p102
    %p104 = scmp.ne.s32.totalorder %s96, %s98
    %p105 = scmp.eq.s32.totalorder %s20, 1
    %p106 = por %p104, %p105
    %p107 = scmp.ne.s32.totalorder %s98, %s99
    %p108 = scmp.eq.s32.totalorder %s20, 0
    %p109 = por %p107, %p108
    %p110 = scmp.ne.s32.totalorder %s98, %s99
    %p111 = scmp.eq.s32.totalorder %s21, 1
    %p112 = por %p110, %p111
    %p114 = scmp.ne.s32.totalorder %s99, %s113
    %p115 = scmp.eq.s32.totalorder %s21, 0
    %p116 = por %p114, %p115
    %s118 = sadd.s32 %s117, 1
    %p121 = scmp.eq.s32.totalorder %s15, 1
    %p122 = scmp.ne.s32.totalorder %s117, %s119
    %p123 = scmp.eq.s32.totalorder %s15, 0
    %p124 = por %p122, %p123
    %p125 = scmp.ne.s32.totalorder %s117, %s119
    %p126 = scmp.eq.s32.totalorder %s20, 1
    %p127 = por %p125, %p126
    %p128 = scmp.ne.s32.totalorder %s119, %s120
    %p129 = scmp.eq.s32.totalorder %s20, 0
    %p130 = por %p128, %p129
    %p131 = scmp.ne.s32.totalorder %s119, %s120
    %p132 = scmp.eq.s32.totalorder %s21, 1
    %p133 = por %p131, %p132
    %p135 = scmp.ne.s32.totalorder %s120, %s134
    %p136 = scmp.eq.s32.totalorder %s21, 0
    %p137 = por %p135, %p136
    %s139 = sadd.s32 %s138, 1
    %p142 = scmp.eq.s32.totalorder %s15, 1
    %p143 = scmp.ne.s32.totalorder %s138, %s140
    %p144 = scmp.eq.s32.totalorder %s15, 0
    %p145 = por %p143, %p144
    %p146 = scmp.ne.s32.totalorder %s138, %s140
    %p147 = scmp.eq.s32.totalorder %s20, 1
    %p148 = por %p146, %p147
    %p149 = scmp.ne.s32.totalorder %s140, %s141
    %p150 = scmp.eq.s32.totalorder %s20, 0
    %p151 = por %p149, %p150
    %p152 = scmp.ne.s32.totalorder %s140, %s141
    %p153 = scmp.eq.s32.totalorder %s21, 1
    %p154 = por %p152, %p153
    %p156 = scmp.ne.s32.totalorder %s141, %s155
    %p157 = scmp.eq.s32.totalorder %s21, 0
    %p158 = por %p156, %p157
    %s160 = sadd.s32 %s159, 1
    %p163 = scmp.eq.s32.totalorder %s15, 1
    %p164 = scmp.ne.s32.totalorder %s159, %s161
    %p165 = scmp.eq.s32.totalorder %s15, 0
    %p166 = por %p164, %p165
    %p167 = scmp.ne.s32.totalorder %s159, %s161
    %p168 = scmp.eq.s32.totalorder %s20, 1
    %p169 = por %p167, %p168
    %p170 = scmp.ne.s32.totalorder %s161, %s162
    %p171 = scmp.eq.s32.totalorder %s20, 0
    %p172 = por %p170, %p171
    %p173 = scmp.ne.s32.totalorder %s161, %s162
    %p174 = scmp.eq.s32.totalorder %s21, 1
    %p175 = por %p173, %p174
    %p177 = scmp.ne.s32.totalorder %s162, %s176
    %p178 = scmp.eq.s32.totalorder %s21, 0
    %p179 = por %p177, %p178
    %s181 = sadd.s32 %s180, 1
    %p184 = scmp.eq.s32.totalorder %s15, 1
    %p185 = scmp.ne.s32.totalorder %s180, %s182
    %p186 = scmp.eq.s32.totalorder %s15, 0
    %p187 = por %p185, %p186
    %p188 = scmp.ne.s32.totalorder %s180, %s182
    %p189 = scmp.eq.s32.totalorder %s20, 1
    %p190 = por %p188, %p189
    %p191 = scmp.ne.s32.totalorder %s182, %s183
    %p192 = scmp.eq.s32.totalorder %s20, 0
    %p193 = por %p191, %p192
    %p194 = scmp.ne.s32.totalorder %s182, %s183
    %p195 = scmp.eq.s32.totalorder %s21, 1
    %p196 = por %p194, %p195
    %p198 = scmp.ne.s32.totalorder %s183, %s197
    %p199 = scmp.eq.s32.totalorder %s21, 0
    %p200 = por %p198, %p199
    %s202 = sadd.s32 %s201, 1
    %p205 = scmp.eq.s32.totalorder %s15, 1
    %p206 = scmp.ne.s32.totalorder %s201, %s203
    %p207 = scmp.eq.s32.totalorder %s15, 0
    %p208 = por %p206, %p207
    %p209 = scmp.ne.s32.totalorder %s201, %s203
    %p210 = scmp.eq.s32.totalorder %s20, 1
    %p211 = por %p209, %p210
    %p212 = scmp.ne.s32.totalorder %s203, %s204
    %p213 = scmp.eq.s32.totalorder %s20, 0
    %p214 = por %p212, %p213
    %p215 = scmp.ne.s32.totalorder %s203, %s204
    %p216 = scmp.eq.s32.totalorder %s21, 1
    %p217 = por %p215, %p216
    %p219 = scmp.ne.s32.totalorder %s204, %s218
    %p220 = scmp.eq.s32.totalorder %s21, 0
    %p221 = por %p219, %p220
    %s222 = ssub.s32 %s15, %s22
    %p223 = scmp.eq.s32.totalorder %s222, 0
    %s225 = sadd.s32 %s224, 1
    %s226 = scalar_select %p223, %s224, %s225
    %p229 = pneg %p223
    %p230 = scmp.eq.s32.totalorder %s15, 1
    %p231 = por %p229, %p230
    %p232 = scmp.ne.s32.totalorder %s224, %s227
    %p233 = scmp.eq.s32.totalorder %s15, 0
    %p234 = por %p232, %p233
    %p235 = scmp.ne.s32.totalorder %s224, %s227
    %p236 = scmp.eq.s32.totalorder %s20, 1
    %p237 = por %p235, %p236
    %p238 = scmp.ne.s32.totalorder %s227, %s228
    %p239 = scmp.eq.s32.totalorder %s20, 0
    %p240 = por %p238, %p239
    %p241 = scmp.ne.s32.totalorder %s227, %s228
    %p242 = scmp.eq.s32.totalorder %s21, 1
    %p243 = por %p241, %p242
    %p245 = scmp.ne.s32.totalorder %s228, %s244
    %p246 = scmp.eq.s32.totalorder %s21, 0
    %p247 = por %p245, %p246
    %p248 = scmp.le.s32.totalorder 1, %s15
    %p249 = scmp.lt.s32.totalorder %s15, 3
    %p250 = pnand %p248, %p249
    %p251 = pneg %p250
    // Predicated region
    $region9: #{up_forward.1} parent=5 // pred_check
      _
    $region10: #{up_forward.1} parent=5 // pred_check_branch
      %253 = sbr.rel (%p250) target = $region12
    $region11: #{up_forward.1} parent=5 // pred_region
      %s254 = ssub.s32 %s15, 1
      // Predicated region
      $region13: #{up_forward.1} parent=11 // pred_check
        %p255 = pneg %p88
      $region14: #{up_forward.1} parent=11 // pred_check_branch
        %257 = sbr.rel (%p255) target = $region16
      $region15: #{up_forward.1} parent=11 // pred_region
        _
      $region16: #{up_forward.1} parent=11 // pred_fallthru
        _
      // Predicated region
      $region17: #{up_forward.1} parent=11 // pred_check
        %p258 = pneg %p109
      $region18: #{up_forward.1} parent=11 // pred_check_branch
        %260 = sbr.rel (%p258) target = $region20
      $region19: #{up_forward.1} parent=11 // pred_region
        _
      $region20: #{up_forward.1} parent=11 // pred_fallthru
        _
      // Predicated region
      $region21: #{up_forward.1} parent=11 // pred_check
        %p261 = pneg %p130
      $region22: #{up_forward.1} parent=11 // pred_check_branch
        %263 = sbr.rel (%p261) target = $region24
      $region23: #{up_forward.1} parent=11 // pred_region
        _
      $region24: #{up_forward.1} parent=11 // pred_fallthru
        _
      // Predicated region
      $region25: #{up_forward.1} parent=11 // pred_check
        %p264 = pneg %p151
      $region26: #{up_forward.1} parent=11 // pred_check_branch
        %266 = sbr.rel (%p264) target = $region28
      $region27: #{up_forward.1} parent=11 // pred_region
        _
      $region28: #{up_forward.1} parent=11 // pred_fallthru
        _
      // Predicated region
      $region29: #{up_forward.1} parent=11 // pred_check
        %p267 = pneg %p172
      $region30: #{up_forward.1} parent=11 // pred_check_branch
        %269 = sbr.rel (%p267) target = $region32
      $region31: #{up_forward.1} parent=11 // pred_region
        _
      $region32: #{up_forward.1} parent=11 // pred_fallthru
        _
      // Predicated region
      $region33: #{up_forward.1} parent=11 // pred_check
        %p270 = pneg %p193
      $region34: #{up_forward.1} parent=11 // pred_check_branch
        %272 = sbr.rel (%p270) target = $region36
      $region35: #{up_forward.1} parent=11 // pred_region
        _
      $region36: #{up_forward.1} parent=11 // pred_fallthru
        _
      // Predicated region
      $region37: #{up_forward.1} parent=11 // pred_check
        %p273 = pneg %p214
      $region38: #{up_forward.1} parent=11 // pred_check_branch
        %275 = sbr.rel (%p273) target = $region40
      $region39: #{up_forward.1} parent=11 // pred_region
        _
      $region40: #{up_forward.1} parent=11 // pred_fallthru
        _
    $region12: #{up_forward.1} parent=5 // pred_fallthru
      _
    %p276 = scmp.lt.s32.totalorder %s15, 2
    // Predicated region
    $region41: #{up_forward.1} parent=5 // pred_check
      %p277 = pneg %p276
    $region42: #{up_forward.1} parent=5 // pred_check_branch
      %279 = sbr.rel (%p277) target = $region44
    $region43: #{up_forward.1} parent=5 // pred_region
      // Predicated region
      $region45: #{up_forward.1} parent=43 // pred_check
        %p280 = pneg %p35
      $region46: #{up_forward.1} parent=43 // pred_check_branch
        %282 = sbr.rel (%p280) target = $region48
      $region47: #{up_forward.1} parent=43 // pred_region
        %p283 = scmp.lt.s32.totalorder %s15, 1
        %s284 = scalar_select %p283, %s15, 1
        %s285 = smul.addr %s284, 4
        %s286 = scalar_lea.vmem %s0, %s285
      $region48: #{up_forward.1} parent=43 // pred_fallthru
        _
      // Predicated region
      $region49: #{up_forward.1} parent=43 // pred_check
        %p287 = pneg %p61
      $region50: #{up_forward.1} parent=43 // pred_check_branch
        %289 = sbr.rel (%p287) target = $region52
      $region51: #{up_forward.1} parent=43 // pred_region
        %p290 = scmp.lt.s32.totalorder %s15, 1
        %s291 = scalar_select %p290, %s15, 1
        %s292 = smul.addr %s291, 2
        %s293 = smul.addr %s292, 4
        %s294 = scalar_lea.vmem %s1, %s293
      $region52: #{up_forward.1} parent=43 // pred_fallthru
        _
    $region44: #{up_forward.1} parent=5 // pred_fallthru
      _
    %p295 = scmp.le.s32.totalorder 1, %s15
    %p296 = scmp.lt.s32.totalorder %s15, 3
    %p297 = pnand %p295, %p296
    %p298 = pneg %p297
    // Predicated region
    $region53: #{up_forward.1} parent=5 // pred_check
      _
    $region54: #{up_forward.1} parent=5 // pred_check_branch
      %300 = sbr.rel (%p297) target = $region56
    $region55: #{up_forward.1} parent=5 // pred_region
      %s301 = ssub.s32 %s15, 1
      %p302 = scmp.lt.s32.totalorder %s20, 1
      %s303 = scalar_select %p302, %s20, 1
      %s304 = smul.addr %s303, 4
      %s305 = scalar_lea.vmem %s0, %s304
      %p306 = pneg %p41
      %p307 = pneg %p38
      %p308 = scmp.lt.s32.totalorder %s20, 1
      %s309 = scalar_select %p308, %s20, 1
      %s310 = smul.addr %s309, 2
      %s311 = smul.addr %s310, 4
      %s312 = scalar_lea.vmem %s1, %s311
      %p313 = pneg %p67
      %p314 = pneg %p64
      %p315 = pneg %p88
      %p316 = pneg %p85
      %p317 = pneg %p109
      %p318 = pneg %p106
      %p319 = pneg %p130
      %p320 = pneg %p127
      %p321 = pneg %p151
      %p322 = pneg %p148
      %p323 = pneg %p172
      %p324 = pneg %p169
      %p325 = pneg %p193
      %p326 = pneg %p190
      %p327 = pneg %p214
      %p328 = pneg %p211
      %p329 = pneg %p240
      %p330 = pneg %p237
      %p331 = scmp.lt.s32.totalorder %s20, 1
      %s332 = scalar_select %p331, %s20, 1
      %s333 = smul.addr %s332, 2
      %s334 = smul.addr %s333, 8
      %s335 = scalar_lea.vmem %s9, %s334
      %p336 = scmp.lt.s32.totalorder %s20, 1
      %s337 = scalar_select %p336, %s20, 1
      %s338 = smul.addr %s337, 4
      %s339 = scalar_lea.vmem %s0, %s338
      %p340 = scmp.lt.s32.totalorder %s20, 1
      %s341 = scalar_select %p340, %s20, 1
      %s342 = smul.addr %s341, 2
      %s343 = smul.addr %s342, 4
      %s344 = scalar_lea.vmem %s1, %s343
      %p345 = scmp.lt.s32.totalorder %s20, 1
      %s346 = scalar_select %p345, %s20, 1
      %s347 = smul.addr %s346, 2
      %s348 = smul.addr %s347, 8
      %s349 = scalar_lea.vmem %s9, %s348
      %v350 = vld [vmem:[%s339] sm:$0xf]
      %v351 = vld [vmem:[%s2] sm:$0xff]
      %v352 = vld [vmem:[%s2 + $0x8] sm:$0xff]
      %v353 = vld [vmem:[%s2 + $0x10] sm:$0xff]
      %v354 = vld [vmem:[%s2 + $0x18] sm:$0xff]
      %v355 = vld [vmem:[%s2 + $0x20] sm:$0xff]
      %v356 = vld [vmem:[%s2 + $0x28] sm:$0xff]
      %v357 = vld [vmem:[%s2 + $0x30] sm:$0xff]
      %v358 = vld [vmem:[%s2 + $0x38] sm:$0xff]
      %v359 = vld [vmem:[%s2 + $0x40] sm:$0xff]
      %v360 = vld [vmem:[%s2 + $0x48] sm:$0xff]
      %v361 = vld [vmem:[%s2 + $0x50] sm:$0xff]
      %v362 = vld [vmem:[%s2 + $0x58] sm:$0xff]
      %v363 = vld [vmem:[%s2 + $0x60] sm:$0xff]
      %v364 = vld [vmem:[%s2 + $0x68] sm:$0xff]
      %v365 = vld [vmem:[%s2 + $0x70] sm:$0xff]
      %v366 = vld [vmem:[%s2 + $0x78] sm:$0xff]
      %vm367 = vcmask 523264
      %v369 = vsel %vm367, %v350, 0
      %371 = vmatpush.msra.mxu0 0.0
      %372 = vmatpush.msra.mxu0 0.0
      %373 = vmatpush.msra.mxu0 0.0
      %374 = vmatpush.msra.mxu0 0.0
      %375 = vmatpush.msra.mxu0 0.0
      %376 = vmatpush.msra.mxu0 0.0
      %377 = vmatpush.msra.mxu0 0.0
      %378 = vmatpush.msra.mxu0 0.0
      %379 = vmatpush.msra.mxu0 %v365
      %380 = vmatpush.msra.mxu0 %v363
      %381 = vmatpush.msra.mxu0 %v361
      %382 = vmatpush.msra.mxu0 %v359
      %383 = vmatpush.msra.mxu0 %v357
      %384 = vmatpush.msra.mxu0 %v355
      %385 = vmatpush.msra.mxu0 %v353
      %386 = vmatpush.msra.mxu0 %v351
      %387 = vmatmul.f32.gmra.mxu0 %v369
      %v388 = vpop.f32.mrf.mxu0
      %v389 = vadd.f32 0.0, %v388
      %390 = vdwg.mxu0
      %391 = vmatpush.msra.mxu0 0.0
      %392 = vmatpush.msra.mxu0 0.0
      %393 = vmatpush.msra.mxu0 0.0
      %394 = vmatpush.msra.mxu0 0.0
      %395 = vmatpush.msra.mxu0 0.0
      %396 = vmatpush.msra.mxu0 0.0
      %397 = vmatpush.msra.mxu0 0.0
      %398 = vmatpush.msra.mxu0 0.0
      %399 = vmatpush.msra.mxu0 %v366
      %400 = vmatpush.msra.mxu0 %v364
      %401 = vmatpush.msra.mxu0 %v362
      %402 = vmatpush.msra.mxu0 %v360
      %403 = vmatpush.msra.mxu0 %v358
      %404 = vmatpush.msra.mxu0 %v356
      %405 = vmatpush.msra.mxu0 %v354
      %406 = vmatpush.msra.mxu0 %v352
      %407 = vmatmul.f32.gmra.mxu0 %v369
      %v408 = vpop.f32.mrf.mxu0
      %v409 = vadd.f32 0.0, %v408
      %410 = vdwg.mxu0
      %v411 = vld [vmem:[%s344] sm:$0xff]
      %413 = vst [vmem:[#allocation1] ss:$2 sm:$0xff] %v411
      %v414 = vld.sshfl [vmem:[#allocation1] sm:$0xff pattern:$0x75316420]
      %v415 = vld.sshfl [vmem:[#allocation1 + $0x8] sm:$0xff pattern:$0x75316420]
      %v420 = vrot.slane %v389, 4
      %v421 = vrot.slane %v409, 4
      %vm424 = vcmask 1043456
      %v425 = vsel %vm424, %v414, %v420
      %v426 = vsel %vm424, %v415, %v421
      %429 = vrot.lane.b32.xlu0 %v425, 17
      %v430 = vpop.permute.xlu0 %429
      %431 = vrot.lane.b32.xlu0 %v426, 17
      %v432 = vpop.permute.xlu0 %431
      %vm433 = vcmask 138240
      %v434 = vsel %vm433, %v430, %v432
      %v438 = vsel %vm433, 0.0, %v430
      %v439 = vsel %vm433, %v432, 0.0
      %v440 = vlaneseq
      %v441 = vand.u32 %v440, 127
      %v442 = vadd.s32 %v441, 128
      %vm443 = vcmp.lt.s32.totalorder %v441, 0
      %v444 = vsub.s32 0, %v441
      %v445 = vsel %vm443, %v444, %v441
      %v446 = vshrl.u32 %v445, 4
      %v447 = vand.u32 %v445, 15
      %v448 = vsub.s32 0, %v447
      %v449 = vsel %vm443, %v448, %v447
      %vm450 = vcmp.lt.s32.totalorder %v442, 0
      %v451 = vsub.s32 0, %v442
      %v452 = vsel %vm450, %v451, %v442
      %v453 = vshrl.u32 %v452, 4
      %v454 = vand.u32 %v452, 15
      %v455 = vsub.s32 0, %v454
      %v456 = vsel %vm450, %v455, %v454
      %vm457 = vcmp.ne.s32.totalorder %v449, 0
      %vm458 = vcmp.ne.s32.totalorder %v456, 0
      %vm459 = vcmp.lt.s32.totalorder %v449, 0
      %vm460 = vcmp.lt.s32.totalorder %v456, 0
      %vm461 = vmand %vm459, %vm457
      %vm462 = vmand %vm460, %vm458
      %v463 = vadd.s32 %v449, 16
      %v464 = vadd.s32 %v456, 16
      %v465 = vsel %vm461, %v463, %v449
      %v466 = vsel %vm462, %v464, %v456
      %vm467 = vcmp.gt.s32.totalorder %v465, 0
      %vm468 = vcmp.gt.s32.totalorder %v466, 0
      %vm469 = vcmp.lt.s32.totalorder %v465, 15
      %vm470 = vcmp.lt.s32.totalorder %v466, 15
      %v471 = vsel %vm467, 1, 0
      %v472 = vsel %vm468, 1, 0
      %vm473 = vcmp.eq.s32.totalorder %v471, 1
      %vm474 = vcmp.eq.s32.totalorder %v472, 1
      %v475 = vsel %vm473, %v438, 0.0
      %v476 = vsel %vm474, %v434, 0.0
      %v477 = vsel %vm469, 1, 0
      %v478 = vsel %vm470, 1, 0
      %vm479 = vcmp.eq.s32.totalorder %v477, 1
      %vm480 = vcmp.eq.s32.totalorder %v478, 1
      %483 = vrot.lane.b32.xlu0 %v438, 126
      %v484 = vpop.permute.xlu0 %483
      %485 = vrot.lane.b32.xlu0 %v434, 126
      %v486 = vpop.permute.xlu0 %485
      %487 = vrot.lane.b32.xlu0 %v439, 126
      %v488 = vpop.permute.xlu0 %487
      %vm489 = vcmask 1031168
      %v490 = vsel %vm489, %v484, %v486
      %v491 = vsel %vm489, %v486, %v488
      %v494 = vsel %vm479, %v490, 0.0
      %v495 = vsel %vm480, %v491, 0.0
      %496 = vrot.lane.b32.xlu0 %v438, 112
      %v497 = vpop.permute.xlu0 %496
      %498 = vrot.lane.b32.xlu0 %v434, 112
      %v499 = vpop.permute.xlu0 %498
      %500 = vrot.lane.b32.xlu0 %v439, 112
      %v501 = vpop.permute.xlu0 %500
      %vm502 = vcmask 916480
      %v503 = vsel %vm502, %v497, %v499
      %v504 = vsel %vm502, %v499, %v501
      %v507 = vsel %vm473, %v503, 0.0
      %v508 = vsel %vm474, %v504, 0.0
      %509 = vrot.lane.b32.xlu0 %v438, 110
      %v510 = vpop.permute.xlu0 %509
      %511 = vrot.lane.b32.xlu0 %v434, 110
      %v512 = vpop.permute.xlu0 %511
      %513 = vrot.lane.b32.xlu0 %v439, 110
      %v514 = vpop.permute.xlu0 %513
      %vm515 = vcmask 900096
      %v516 = vsel %vm515, %v510, %v512
      %v517 = vsel %vm515, %v512, %v514
      %v520 = vsel %vm479, %v516, 0.0
      %v521 = vsel %vm480, %v517, 0.0
      %522 = vrot.lane.b32.xlu0 %v438, 96
      %v523 = vpop.permute.xlu0 %522
      %524 = vrot.lane.b32.xlu0 %v434, 96
      %v525 = vpop.permute.xlu0 %524
      %526 = vrot.lane.b32.xlu0 %v439, 96
      %v527 = vpop.permute.xlu0 %526
      %vm528 = vcmask 785408
      %v529 = vsel %vm528, %v523, %v525
      %v530 = vsel %vm528, %v525, %v527
      %v533 = vsel %vm473, %v529, 0.0
      %v534 = vsel %vm474, %v530, 0.0
      %535 = vrot.lane.b32.xlu0 %v438, 94
      %v536 = vpop.permute.xlu0 %535
      %537 = vrot.lane.b32.xlu0 %v434, 94
      %v538 = vpop.permute.xlu0 %537
      %539 = vrot.lane.b32.xlu0 %v439, 94
      %v540 = vpop.permute.xlu0 %539
      %vm541 = vcmask 769024
      %v542 = vsel %vm541, %v536, %v538
      %v543 = vsel %vm541, %v538, %v540
      %v546 = vsel %vm479, %v542, 0.0
      %v547 = vsel %vm480, %v543, 0.0
      %548 = vrot.lane.b32.xlu0 %v438, 127
      %v549 = vpop.permute.xlu0 %548
      %550 = vrot.lane.b32.xlu0 %v434, 127
      %v551 = vpop.permute.xlu0 %550
      %552 = vrot.lane.b32.xlu0 %v439, 127
      %v553 = vpop.permute.xlu0 %552
      %vm554 = vcmask 1039360
      %v555 = vsel %vm554, %v549, %v551
      %v556 = vsel %vm554, %v551, %v553
      %559 = vrot.lane.b32.xlu0 %v438, 111
      %v560 = vpop.permute.xlu0 %559
      %561 = vrot.lane.b32.xlu0 %v434, 111
      %v562 = vpop.permute.xlu0 %561
      %563 = vrot.lane.b32.xlu0 %v439, 111
      %v564 = vpop.permute.xlu0 %563
      %vm565 = vcmask 908288
      %v566 = vsel %vm565, %v560, %v562
      %v567 = vsel %vm565, %v562, %v564
      %570 = vrot.lane.b32.xlu0 %v438, 95
      %v571 = vpop.permute.xlu0 %570
      %572 = vrot.lane.b32.xlu0 %v434, 95
      %v573 = vpop.permute.xlu0 %572
      %574 = vrot.lane.b32.xlu0 %v439, 95
      %v575 = vpop.permute.xlu0 %574
      %vm576 = vcmask 777216
      %v577 = vsel %vm576, %v571, %v573
      %v578 = vsel %vm576, %v573, %v575
      %v581 = vld [vmem:[%s3] sm:$0xff]
      %vm582 = vcmask 588800
      %v584 = vsel %vm582, %v581, 0
      %586 = vmatpush.msra.mxu0 0.0
      %587 = vmatpush.msra.mxu0 0.0
      %588 = vmatpush.msra.mxu0 0.0
      %589 = vmatpush.msra.mxu0 0.0
      %590 = vmatpush.msra.mxu0 0.0
      %591 = vmatpush.msra.mxu0 0.0
      %592 = vmatpush.msra.mxu0 0.0
      %593 = vmatpush.msra.mxu0 %v546
      %594 = vmatpush.msra.mxu0 %v577
      %595 = vmatpush.msra.mxu0 %v533
      %596 = vmatpush.msra.mxu0 %v520
      %597 = vmatpush.msra.mxu0 %v566
      %598 = vmatpush.msra.mxu0 %v507
      %599 = vmatpush.msra.mxu0 %v494
      %600 = vmatpush.msra.mxu0 %v555
      %601 = vmatpush.msra.mxu0 %v475
      %602 = vmatmul.f32.gmra.mxu0 %v584
      %v603 = vpop.f32.mrf.mxu0
      %v604 = vadd.f32 0.0, %v603
      %605 = vdwg.mxu0
      %606 = vmatpush.msra.mxu0 0.0
      %607 = vmatpush.msra.mxu0 0.0
      %608 = vmatpush.msra.mxu0 0.0
      %609 = vmatpush.msra.mxu0 0.0
      %610 = vmatpush.msra.mxu0 0.0
      %611 = vmatpush.msra.mxu0 0.0
      %612 = vmatpush.msra.mxu0 0.0
      %613 = vmatpush.msra.mxu0 %v547
      %614 = vmatpush.msra.mxu0 %v578
      %615 = vmatpush.msra.mxu0 %v534
      %616 = vmatpush.msra.mxu0 %v521
      %617 = vmatpush.msra.mxu0 %v567
      %618 = vmatpush.msra.mxu0 %v508
      %619 = vmatpush.msra.mxu0 %v495
      %620 = vmatpush.msra.mxu0 %v556
      %621 = vmatpush.msra.mxu0 %v476
      %622 = vmatmul.f32.gmra.mxu0 %v584
      %v623 = vpop.f32.mrf.mxu0
      %v624 = vadd.f32 0.0, %v623
      %625 = vdwg.mxu0
      %v626 = vld [vmem:[%s4] sm:$0xff]
      %628 = vset.pattern.permute.xlu0 0
      %629 = vperm.xlu0 %628, %v626
      %v630 = vpop.permute.xlu0 %629
      %v632 = vmul.f32 %v604, %v630
      %v633 = vmul.f32 %v624, %v630
      %v634 = vld [vmem:[%s5] sm:$0xff]
      %636 = vset.pattern.permute.xlu0 0
      %637 = vperm.xlu0 %636, %v634
      %v638 = vpop.permute.xlu0 %637
      %v640 = vadd.f32 %v632, %v638
      %v641 = vadd.f32 %v633, %v638
      %v642 = vmax.f32 %v640, 0.0
      %v643 = vmax.f32 %v641, 0.0
      %646 = vrot.lane.b32.xlu0 %v642, 17
      %v647 = vpop.permute.xlu0 %646
      %648 = vrot.lane.b32.xlu0 %v643, 17
      %v649 = vpop.permute.xlu0 %648
      %v650 = vsel %vm433, %v647, %v649
      %v654 = vsel %vm433, 0.0, %v647
      %v655 = vsel %vm433, %v649, 0.0
      %v656 = vsel %vm473, %v654, 0.0
      %v657 = vsel %vm474, %v650, 0.0
      %660 = vrot.lane.b32.xlu0 %v654, 126
      %v661 = vpop.permute.xlu0 %660
      %662 = vrot.lane.b32.xlu0 %v650, 126
      %v663 = vpop.permute.xlu0 %662
      %664 = vrot.lane.b32.xlu0 %v655, 126
      %v665 = vpop.permute.xlu0 %664
      %v666 = vsel %vm489, %v661, %v663
      %v667 = vsel %vm489, %v663, %v665
      %v670 = vsel %vm479, %v666, 0.0
      %v671 = vsel %vm480, %v667, 0.0
      %672 = vrot.lane.b32.xlu0 %v654, 112
      %v673 = vpop.permute.xlu0 %672
      %674 = vrot.lane.b32.xlu0 %v650, 112
      %v675 = vpop.permute.xlu0 %674
      %676 = vrot.lane.b32.xlu0 %v655, 112
      %v677 = vpop.permute.xlu0 %676
      %v678 = vsel %vm502, %v673, %v675
      %v679 = vsel %vm502, %v675, %v677
      %v682 = vsel %vm473, %v678, 0.0
      %v683 = vsel %vm474, %v679, 0.0
      %684 = vrot.lane.b32.xlu0 %v654, 110
      %v685 = vpop.permute.xlu0 %684
      %686 = vrot.lane.b32.xlu0 %v650, 110
      %v687 = vpop.permute.xlu0 %686
      %688 = vrot.lane.b32.xlu0 %v655, 110
      %v689 = vpop.permute.xlu0 %688
      %v690 = vsel %vm515, %v685, %v687
      %v691 = vsel %vm515, %v687, %v689
      %v694 = vsel %vm479, %v690, 0.0
      %v695 = vsel %vm480, %v691, 0.0
      %696 = vrot.lane.b32.xlu0 %v654, 96
      %v697 = vpop.permute.xlu0 %696
      %698 = vrot.lane.b32.xlu0 %v650, 96
      %v699 = vpop.permute.xlu0 %698
      %700 = vrot.lane.b32.xlu0 %v655, 96
      %v701 = vpop.permute.xlu0 %700
      %v702 = vsel %vm528, %v697, %v699
      %v703 = vsel %vm528, %v699, %v701
      %v706 = vsel %vm473, %v702, 0.0
      %v707 = vsel %vm474, %v703, 0.0
      %708 = vrot.lane.b32.xlu0 %v654, 94
      %v709 = vpop.permute.xlu0 %708
      %710 = vrot.lane.b32.xlu0 %v650, 94
      %v711 = vpop.permute.xlu0 %710
      %712 = vrot.lane.b32.xlu0 %v655, 94
      %v713 = vpop.permute.xlu0 %712
      %v714 = vsel %vm541, %v709, %v711
      %v715 = vsel %vm541, %v711, %v713
      %v718 = vsel %vm479, %v714, 0.0
      %v719 = vsel %vm480, %v715, 0.0
      %720 = vrot.lane.b32.xlu0 %v654, 127
      %v721 = vpop.permute.xlu0 %720
      %722 = vrot.lane.b32.xlu0 %v650, 127
      %v723 = vpop.permute.xlu0 %722
      %724 = vrot.lane.b32.xlu0 %v655, 127
      %v725 = vpop.permute.xlu0 %724
      %v726 = vsel %vm554, %v721, %v723
      %v727 = vsel %vm554, %v723, %v725
      %730 = vrot.lane.b32.xlu0 %v654, 111
      %v731 = vpop.permute.xlu0 %730
      %732 = vrot.lane.b32.xlu0 %v650, 111
      %v733 = vpop.permute.xlu0 %732
      %734 = vrot.lane.b32.xlu0 %v655, 111
      %v735 = vpop.permute.xlu0 %734
      %v736 = vsel %vm565, %v731, %v733
      %v737 = vsel %vm565, %v733, %v735
      %740 = vrot.lane.b32.xlu0 %v654, 95
      %v741 = vpop.permute.xlu0 %740
      %742 = vrot.lane.b32.xlu0 %v650, 95
      %v743 = vpop.permute.xlu0 %742
      %744 = vrot.lane.b32.xlu0 %v655, 95
      %v745 = vpop.permute.xlu0 %744
      %v746 = vsel %vm576, %v741, %v743
      %v747 = vsel %vm576, %v743, %v745
      %v750 = vld [vmem:[%s6] sm:$0xff]
      %v752 = vsel %vm582, %v750, 0
      %754 = vmatpush.msra.mxu0 0.0
      %755 = vmatpush.msra.mxu0 0.0
      %756 = vmatpush.msra.mxu0 0.0
      %757 = vmatpush.msra.mxu0 0.0
      %758 = vmatpush.msra.mxu0 0.0
      %759 = vmatpush.msra.mxu0 0.0
      %760 = vmatpush.msra.mxu0 0.0
      %761 = vmatpush.msra.mxu0 %v718
      %762 = vmatpush.msra.mxu0 %v746
      %763 = vmatpush.msra.mxu0 %v706
      %764 = vmatpush.msra.mxu0 %v694
      %765 = vmatpush.msra.mxu0 %v736
      %766 = vmatpush.msra.mxu0 %v682
      %767 = vmatpush.msra.mxu0 %v670
      %768 = vmatpush.msra.mxu0 %v726
      %769 = vmatpush.msra.mxu0 %v656
      %770 = vmatmul.f32.gmra.mxu0 %v752
      %v771 = vpop.f32.mrf.mxu0
      %v772 = vadd.f32 0.0, %v771
      %773 = vdwg.mxu0
      %774 = vmatpush.msra.mxu0 0.0
      %775 = vmatpush.msra.mxu0 0.0
      %776 = vmatpush.msra.mxu0 0.0
      %777 = vmatpush.msra.mxu0 0.0
      %778 = vmatpush.msra.mxu0 0.0
      %779 = vmatpush.msra.mxu0 0.0
      %780 = vmatpush.msra.mxu0 0.0
      %781 = vmatpush.msra.mxu0 %v719
      %782 = vmatpush.msra.mxu0 %v747
      %783 = vmatpush.msra.mxu0 %v707
      %784 = vmatpush.msra.mxu0 %v695
      %785 = vmatpush.msra.mxu0 %v737
      %786 = vmatpush.msra.mxu0 %v683
      %787 = vmatpush.msra.mxu0 %v671
      %788 = vmatpush.msra.mxu0 %v727
      %789 = vmatpush.msra.mxu0 %v657
      %790 = vmatmul.f32.gmra.mxu0 %v752
      %v791 = vpop.f32.mrf.mxu0
      %v792 = vadd.f32 0.0, %v791
      %793 = vdwg.mxu0
      %v794 = vld [vmem:[%s7] sm:$0xff]
      %796 = vset.pattern.permute.xlu0 0
      %797 = vperm.xlu0 %796, %v794
      %v798 = vpop.permute.xlu0 %797
      %v800 = vmul.f32 %v772, %v798
      %v801 = vmul.f32 %v792, %v798
      %v802 = vld [vmem:[%s8] sm:$0xff]
      %804 = vset.pattern.permute.xlu0 0
      %805 = vperm.xlu0 %804, %v802
      %v806 = vpop.permute.xlu0 %805
      %v808 = vadd.f32 %v800, %v806
      %v809 = vadd.f32 %v801, %v806
      %v810 = vmax.f32 %v808, 0.0
      %v811 = vmax.f32 %v809, 0.0
      %812 = vst [vmem:[%s349] sm:$0xff] %v810
      %813 = vst [vmem:[%s349 + $0x8] sm:$0xff] %v811
      %p814 = scmp.lt.s32.totalorder %s20, 1
      %s815 = scalar_select %p814, %s20, 1
      %s816 = smul.addr %s815, 2
      %s817 = smul.addr %s816, 8
      %s818 = scalar_lea.vmem %s9, %s817
      // Predicated region
      $region57: #{up_forward.1} parent=55 // pred_check
        %p819 = pneg %p237
      $region58: #{up_forward.1} parent=55 // pred_check_branch
        %821 = sbr.rel (%p819) target = $region60
      $region59: #{up_forward.1} parent=55 // pred_region
        _
      $region60: #{up_forward.1} parent=55 // pred_fallthru
        _
    $region56: #{up_forward.1} parent=5 // pred_fallthru
      _
    %p822 = scmp.le.s32.totalorder 2, %s15
    // Predicated region
    $region61: #{up_forward.1} parent=5 // pred_check
      %p823 = pneg %p822
    $region62: #{up_forward.1} parent=5 // pred_check_branch
      %825 = sbr.rel (%p823) target = $region64
    $region63: #{up_forward.1} parent=5 // pred_region
      %s826 = ssub.s32 %s15, 2
      // Predicated region
      $region65: #{up_forward.1} parent=63 // pred_check
        %p827 = pneg %p243
      $region66: #{up_forward.1} parent=63 // pred_check_branch
        %829 = sbr.rel (%p827) target = $region68
      $region67: #{up_forward.1} parent=63 // pred_region
        %p830 = scmp.lt.s32.totalorder %s21, 1
        %s831 = scalar_select %p830, %s21, 1
        %s832 = smul.addr %s831, 2
        %s833 = smul.addr %s832, 8
        %s834 = scalar_lea.vmem %s9, %s833
      $region68: #{up_forward.1} parent=63 // pred_fallthru
        _
    $region64: #{up_forward.1} parent=5 // pred_fallthru
      _
  $region6: #{up_forward.1} parent=0 // loop_footer
    %s19 = sadd.s32 1, %s15
  $region7: #{up_forward.1} parent=0 // loop_footer_branch
    %14 = sbr.rel target = $region3
  $region8: #{up_forward.1} parent=0 // loop_exit
    _

</llo_original>
